<compile_context>
chip_gen: v6e
topology: v6e:2x2x1
jax: 0.10.0
libtpu: 0.0.40
codegen_flags: <defaults>
</compile_context>

<pallas_src>
import jax
import jax.numpy as jnp
from jax.experimental import pallas as pl
from jax.experimental.pallas import tpu as pltpu


def _round_up(x, m):
    return ((x + m - 1) // m) * m


def linear_kernel(x_ref, w_ref, b_ref, o_ref, acc_ref):
    """One (tm, tn) output tile; accumulate over the K grid axis in f32."""
    k = pl.program_id(2)

    @pl.when(k == 0)
    def _():
        acc_ref[...] = jnp.zeros_like(acc_ref)

    # Hot path: bf16 x bf16 -> f32 on the MXU.
    acc_ref[...] += jnp.dot(
        x_ref[...], w_ref[...], preferred_element_type=jnp.float32
    )

    # Epilogue: add bias once per output tile, downcast, store lane-dense.
    @pl.when(k == pl.num_programs(2) - 1)
    def _():
        o_ref[...] = (acc_ref[...] + b_ref[...]).astype(o_ref.dtype)


def base_classifier_forward(x, w, b, *, tm=256, tn=256, tk=512):
    """y = x @ w.T + b  ==  nn.Linear(in_dim, out_dim, bias=True)(x).

    x: (B, in_dim) float32
    w: (out_dim, in_dim) float32   (PyTorch Linear weight layout)
    b: (out_dim,)  float32
    """
    B, in_dim = x.shape
    out_dim = w.shape[0]

    # Clamp tiles to the 128-aligned problem size so small problems don't over-pad,
    # while keeping every tile dim a multiple of 128 (lane-dense, MXU-friendly).
    tm = min(tm, _round_up(B, 128))
    tn = min(tn, _round_up(out_dim, 128))
    tk = min(tk, _round_up(in_dim, 128))

    Bp = _round_up(B, tm)
    Kp = _round_up(in_dim, tk)
    Np = _round_up(out_dim, tn)

    # bf16 operands (accumulation stays f32 inside the kernel); zero padding is exact
    # for the matmul and the padded output region is sliced away below.
    xp = jnp.zeros((Bp, Kp), jnp.bfloat16).at[:B, :in_dim].set(
        x.astype(jnp.bfloat16))
    wtp = jnp.zeros((Kp, Np), jnp.bfloat16).at[:in_dim, :out_dim].set(
        w.T.astype(jnp.bfloat16))
    bp = jnp.zeros((1, Np), jnp.float32).at[:, :out_dim].set(
        b.reshape(1, out_dim).astype(jnp.float32))

    grid = (Bp // tm, Np // tn, Kp // tk)

    out = pl.pallas_call(
        linear_kernel,
        out_shape=jax.ShapeDtypeStruct((Bp, Np), jnp.float32),
        grid_spec=pltpu.PrefetchScalarGridSpec(
            num_scalar_prefetch=0,
            grid=grid,
            in_specs=[
                pl.BlockSpec((tm, tk), lambda i, j, k: (i, k)),   # activations
                pl.BlockSpec((tk, tn), lambda i, j, k: (k, j)),   # weight (transposed)
                pl.BlockSpec((1, tn), lambda i, j, k: (0, j)),    # bias
            ],
            out_specs=pl.BlockSpec((tm, tn), lambda i, j, k: (i, j)),
            scratch_shapes=[pltpu.VMEM((tm, tn), jnp.float32)],
        ),
        compiler_params=pltpu.CompilerParams(
            dimension_semantics=("parallel", "parallel", "arbitrary"),
            vmem_limit_bytes=32 * 1024 * 1024,  # tiles use ~2 MiB double-buffered
        ),
    )(xp, wtp, bp)

    return out[:B, :out_dim].astype(x.dtype)


if __name__ == "__main__":
    # Small, non-tile-aligned shapes: exercises padding, multi-tile M/N grid and the
    # multi-step K reduction (with tm=tn=tk=128 below -> grid (2, 2, 3)).
    B, in_dim, out_dim = 200, 300, 150

    key = jax.random.PRNGKey(0)
    kx, kw, kb = jax.random.split(key, 3)

    # PyTorch nn.Linear default init: U(-1/sqrt(in_dim), 1/sqrt(in_dim)).
    bound = 1.0 / (in_dim ** 0.5)
    w = jax.random.uniform(kw, (out_dim, in_dim), jnp.float32, -bound, bound)
    b = jax.random.uniform(kb, (out_dim,), jnp.float32, -bound, bound)
    x = jax.random.normal(kx, (B, in_dim), jnp.float32)

    y = base_classifier_forward(x, w, b, tm=128, tn=128, tk=128)
    y = jax.block_until_ready(y)

    # Reference 1: same bf16-operand / f32-accumulate math the kernel performs.
    y_ref_bf16 = jnp.dot(
        x.astype(jnp.bfloat16), w.T.astype(jnp.bfloat16),
        preferred_element_type=jnp.float32) + b.reshape(1, out_dim)
    # Reference 2: full-precision PyTorch Linear semantics.
    y_ref_f32 = x @ w.T + b.reshape(1, out_dim)

    assert y.shape == (B, out_dim)
    assert jnp.allclose(y, y_ref_bf16, atol=1e-3, rtol=1e-3), \
        float(jnp.max(jnp.abs(y - y_ref_bf16)))
    assert jnp.allclose(y, y_ref_f32, atol=5e-2, rtol=5e-2), \
        float(jnp.max(jnp.abs(y - y_ref_f32)))

    print("KERNEL_OK")
</pallas_src>

<mosaic_0001>
module attributes {stable_mosaic.version = 11 : i64} {
  func.func @linear_kernel(%arg0: i32, %arg1: i32, %arg2: i32, %arg3: memref<128x128xbf16, #tpu.memory_space<vmem>>, %arg4: memref<128x128xbf16, #tpu.memory_space<vmem>>, %arg5: memref<1x128xf32, #tpu.memory_space<vmem>>, %arg6: memref<128x128xf32, #tpu.memory_space<vmem>>, %arg7: memref<128x128xf32, #tpu.memory_space<vmem>>) attributes {dimension_semantics = [#tpu.dimension_semantics<parallel>, #tpu.dimension_semantics<parallel>, #tpu.dimension_semantics<arbitrary>], iteration_bounds = array<i64: 2, 2, 3>, scalar_prefetch = 0 : i64, scratch_operands = 1 : i64, tpu.core_type = #tpu.core_type<tc>, window_params = [{transform_indices = @transform_0, window_bounds = array<i64: 128, 128>}, {transform_indices = @transform_1, window_bounds = array<i64: 128, 128>}, {transform_indices = @transform_2, window_bounds = array<i64: 1, 128>}, {transform_indices = @transform_3, window_bounds = array<i64: 128, 128>}]} {
    %c0_i32 = arith.constant 0 : i32
    %0 = arith.cmpi eq, %arg2, %c0_i32 : i32
    %1 = arith.extui %0 : i1 to i32
    %c0_i32_0 = arith.constant 0 : i32
    %2 = arith.cmpi ne, %1, %c0_i32_0 : i32
    scf.if %2 {
      %cst_9 = arith.constant 0.000000e+00 : f32
      %12 = vector.broadcast %cst_9 : f32 to vector<128x128xf32>
      %c0_10 = arith.constant 0 : index
      %c0_11 = arith.constant 0 : index
      %13 = vector.load %arg7[%c0_10, %c0_11] : memref<128x128xf32, #tpu.memory_space<vmem>>, vector<128x128xf32>
      tpu.vector_store %arg7[%c0_10, %c0_11], %12 {strides = array<i32>} : memref<128x128xf32, #tpu.memory_space<vmem>>, vector<128x128xf32>,
    } else {
    }
    %c0 = arith.constant 0 : index
    %c0_1 = arith.constant 0 : index
    %3 = vector.load %arg7[%c0, %c0_1] : memref<128x128xf32, #tpu.memory_space<vmem>>, vector<128x128xf32>
    %c0_2 = arith.constant 0 : index
    %c0_3 = arith.constant 0 : index
    %4 = vector.load %arg3[%c0_2, %c0_3] : memref<128x128xbf16, #tpu.memory_space<vmem>>, vector<128x128xbf16>
    %c0_4 = arith.constant 0 : index
    %c0_5 = arith.constant 0 : index
    %5 = vector.load %arg4[%c0_4, %c0_5] : memref<128x128xbf16, #tpu.memory_space<vmem>>, vector<128x128xbf16>
    %cst = arith.constant dense<0.000000e+00> : vector<128x128xf32>
    %6 = tpu.matmul %4, %5, %cst {dimension_numbers = #tpu.dot_dimension_numbers<[1], [0], [0], [1], [0, 0, 1, 1], [], []>} : vector<128x128xbf16>, vector<128x128xbf16>, vector<128x128xf32> -> vector<128x128xf32>
    %7 = arith.addf %3, %6 : vector<128x128xf32>
    %c0_6 = arith.constant 0 : index
    %c0_7 = arith.constant 0 : index
    %8 = vector.load %arg7[%c0_6, %c0_7] : memref<128x128xf32, #tpu.memory_space<vmem>>, vector<128x128xf32>
    tpu.vector_store %arg7[%c0_6, %c0_7], %7 {strides = array<i32>} : memref<128x128xf32, #tpu.memory_space<vmem>>, vector<128x128xf32>,
    %c2_i32 = arith.constant 2 : i32
    %9 = arith.cmpi eq, %arg2, %c2_i32 : i32
    %10 = arith.extui %9 : i1 to i32
    %c0_i32_8 = arith.constant 0 : i32
    %11 = arith.cmpi ne, %10, %c0_i32_8 : i32
    scf.if %11 {
      %c0_9 = arith.constant 0 : index
      %c0_10 = arith.constant 0 : index
      %12 = vector.load %arg7[%c0_9, %c0_10] : memref<128x128xf32, #tpu.memory_space<vmem>>, vector<128x128xf32>
      %c0_11 = arith.constant 0 : index
      %c0_12 = arith.constant 0 : index
      %13 = vector.load %arg5[%c0_11, %c0_12] : memref<1x128xf32, #tpu.memory_space<vmem>>, vector<1x128xf32>
      %14 = vector.broadcast %13 : vector<1x128xf32> to vector<128x128xf32>
      %15 = arith.addf %12, %14 : vector<128x128xf32>
      %c0_13 = arith.constant 0 : index
      %c0_14 = arith.constant 0 : index
      %16 = vector.load %arg6[%c0_13, %c0_14] : memref<128x128xf32, #tpu.memory_space<vmem>>, vector<128x128xf32>
      tpu.vector_store %arg6[%c0_13, %c0_14], %15 {strides = array<i32>} : memref<128x128xf32, #tpu.memory_space<vmem>>, vector<128x128xf32>,
    } else {
    }
    return
  }
  func.func @transform_0(%arg0: i32, %arg1: i32, %arg2: i32) -> (i32, i32) {
    %c0_i32 = arith.constant 0 : i32
    return %arg0, %arg2 : i32, i32
  }
  func.func @transform_1(%arg0: i32, %arg1: i32, %arg2: i32) -> (i32, i32) {
    %c0_i32 = arith.constant 0 : i32
    return %arg2, %arg1 : i32, i32
  }
  func.func @transform_2(%arg0: i32, %arg1: i32, %arg2: i32) -> (i32, i32) {
    %c0_i32 = arith.constant 0 : i32
    %c0_i32_0 = arith.constant 0 : i32
    return %c0_i32, %arg1 : i32, i32
  }
  func.func @transform_3(%arg0: i32, %arg1: i32, %arg2: i32) -> (i32, i32) {
    %c0_i32 = arith.constant 0 : i32
    return %arg0, %arg1 : i32, i32
  }
}

</mosaic_0001>

<llo_original>
// kernel: tpu_custom_call.1
$region0: #{tpu_custom_call.1}
  #allocation0 [shape = 'u32[]', space=smem, size = 0x4, offset = 0x4, fixed_abs, tag = 'smem constant byte address 0x4 - core index']
  #allocation1 [shape = 'u32[144,128]{1,0:T(1,128)}', space=vmem, size = 0x12000, scoped, tag = 'internal scratch']
  #allocation2 [shape = 'f32[128,128]{1,0:T(8,128)}', space=vmem, size = 0x10000, scoped, tag = 'scratch operand']
  %s0 = inlined_call_operand.hbm [shape: bf16[256,384], index: 0, kind: input, shape index: {}]
  %s1 = inlined_call_operand.hbm [shape: bf16[384,256], index: 1, kind: input, shape index: {}]
  %s2 = inlined_call_operand.vmem [shape: f32[1,256], index: 2, kind: input, shape index: {}]
  %s3 = inlined_call_operand.hbm [shape: f32[256,256], index: 3, kind: output, shape index: {}]
  %s4 = sld [smem:[#allocation0]]
  $region61: #{tpu_custom_call.1} parent=0
    _
  %s6 = ssub.s32 1, %s4
  %s7 = scalar_select 0, %s6, %s4
  $region1: #{tpu_custom_call.1} parent=0
    #allocation3 [shape = 'u8[65536]{0}', space=vmem, size = 0x10000, scoped, tag = 'input window, operand 0']
    #allocation4 [shape = 's32[2]{0}', space=sflag, size = 0x8, scoped, tag = 'scoped memory for tpu_custom_call.1']
    #allocation5 [shape = 's32[2]{0}', space=sflag, size = 0x8, scoped, tag = 'scoped memory for tpu_custom_call.1']
    #allocation6 [shape = 'u8[65536]{0}', space=vmem, size = 0x10000, scoped, tag = 'input window, operand 1']
    #allocation7 [shape = 's32[2]{0}', space=sflag, size = 0x8, scoped, tag = 'scoped memory for tpu_custom_call.1']
    #allocation8 [shape = 'u8[131072]{0}', space=vmem, size = 0x20000, scoped, tag = 'output window, operand 0']
    %8 = vsyncpa [#allocation4], 0
    %s9 = scalar_lea.sflag [#allocation4], 1
    %10 = vsyncpa %s9, 0
    %11 = vsyncpa [#allocation7], 0
    %s12 = scalar_lea.sflag [#allocation7], 1
    %13 = vsyncpa %s12, 0
    %14 = vsyncpa [#allocation5], 0
    %s15 = scalar_lea.sflag [#allocation5], 1
    %16 = vsyncpa %s15, 0
    loop: start=0, step=1, limit=14
    $region2: #{tpu_custom_call.1} parent=1 // loop_pre_header
      _
    $region3: #{tpu_custom_call.1} parent=1 // loop_header
      %s18 = sphi 0, %s22
      %p19 = scmp.ge.s32.totalorder %s18, 14
      %s25 = sphi 0, %s44
      %s26 = sphi 0, %s40
      %s27 = sphi 0, %s36
      %s28 = sphi 0, %s25
      %s29 = sphi 0, %s26
      %s30 = sphi 0, %s27
      %s31 = sphi 0, %s28
      %s32 = sphi 0, %s29
      %s33 = sphi 0, %s30
      %s49 = sphi 0, %s51
      %s52 = sphi 0, %s49
      %s53 = sphi 0, %s52
      %s69 = sphi 0, %s53
      %s77 = sphi 0, %s79
      %s80 = sphi 0, %s77
      %s81 = sphi 0, %s80
      %s97 = sphi 0, %s81
      %s103 = sphi 0, %s105
      %s106 = sphi 0, %s103
      %s107 = sphi 0, %s106
      %s123 = sphi 0, %s107
      %s131 = sphi 0, %s133
      %s134 = sphi 0, %s131
      %s135 = sphi 0, %s134
      %s151 = sphi 0, %s135
    $region4: #{tpu_custom_call.1} parent=1 // loop_header_branch
      %21 = sbr.rel (%p19) target = $region8
    $region5: #{tpu_custom_call.1} parent=1 // loop_body
      %s23 = ssub.s32 %s18, 1
      %s24 = ssub.s32 %s18, 2
      %s34 = sadd.s32 1, %s27
      %p35 = scmp.ge.s32.totalorder %s34, 3
      %s36 = scalar_select %p35, 0, %s34
      %s37 = sadd.s32 1, %s26
      %s38 = scalar_select %p35, %s37, %s26
      %p39 = scmp.ge.s32.totalorder %s38, 2
      %s40 = scalar_select %p39, 0, %s38
      %s41 = sadd.s32 1, %s25
      %s42 = scalar_select %p39, %s41, %s25
      %p43 = scmp.ge.s32.totalorder %s42, 2
      %s44 = scalar_select %p43, 0, %s42
      %s45 = ssub.s32 %s25, %s44
      %s46 = ssub.s32 %s27, %s36
      %s47 = sor.u32 %s45, %s46
      %p48 = scmp.eq.s32.totalorder %s47, 0
      %s50 = sadd.s32 %s49, 1
      %s51 = scalar_select %p48, %s49, %s50
      %p54 = pneg %p48
      %p55 = scmp.eq.s32.totalorder %s18, 11
      %p56 = por %p54, %p55
      %p57 = scmp.ne.s32.totalorder %s49, %s52
      %p58 = scmp.eq.s32.totalorder %s18, 0
      %p59 = por %p57, %p58
      %p60 = scmp.ne.s32.totalorder %s49, %s52
      %p61 = scmp.eq.s32.totalorder %s23, 11
      %p62 = por %p60, %p61
      %p63 = scmp.ne.s32.totalorder %s52, %s53
      %p64 = scmp.eq.s32.totalorder %s23, 0
      %p65 = por %p63, %p64
      %p66 = scmp.ne.s32.totalorder %s52, %s53
      %p67 = scmp.eq.s32.totalorder %s24, 11
      %p68 = por %p66, %p67
      %p70 = scmp.ne.s32.totalorder %s53, %s69
      %p71 = scmp.eq.s32.totalorder %s24, 0
      %p72 = por %p70, %p71
      %s73 = ssub.s32 %s27, %s36
      %s74 = ssub.s32 %s26, %s40
      %s75 = sor.u32 %s73, %s74
      %p76 = scmp.eq.s32.totalorder %s75, 0
      %s78 = sadd.s32 %s77, 1
      %s79 = scalar_select %p76, %s77, %s78
      %p82 = pneg %p76
      %p83 = scmp.eq.s32.totalorder %s18, 11
      %p84 = por %p82, %p83
      %p85 = scmp.ne.s32.totalorder %s77, %s80
      %p86 = scmp.eq.s32.totalorder %s18, 0
      %p87 = por %p85, %p86
      %p88 = scmp.ne.s32.totalorder %s77, %s80
      %p89 = scmp.eq.s32.totalorder %s23, 11
      %p90 = por %p88, %p89
      %p91 = scmp.ne.s32.totalorder %s80, %s81
      %p92 = scmp.eq.s32.totalorder %s23, 0
      %p93 = por %p91, %p92
      %p94 = scmp.ne.s32.totalorder %s80, %s81
      %p95 = scmp.eq.s32.totalorder %s24, 11
      %p96 = por %p94, %p95
      %p98 = scmp.ne.s32.totalorder %s81, %s97
      %p99 = scmp.eq.s32.totalorder %s24, 0
      %p100 = por %p98, %p99
      %s101 = ssub.s32 %s26, %s40
      %p102 = scmp.eq.s32.totalorder %s101, 0
      %s104 = sadd.s32 %s103, 1
      %s105 = scalar_select %p102, %s103, %s104
      %p108 = pneg %p102
      %p109 = scmp.eq.s32.totalorder %s18, 11
      %p110 = por %p108, %p109
      %p111 = scmp.ne.s32.totalorder %s103, %s106
      %p112 = scmp.eq.s32.totalorder %s18, 0
      %p113 = por %p111, %p112
      %p114 = scmp.ne.s32.totalorder %s103, %s106
      %p115 = scmp.eq.s32.totalorder %s23, 11
      %p116 = por %p114, %p115
      %p117 = scmp.ne.s32.totalorder %s106, %s107
      %p118 = scmp.eq.s32.totalorder %s23, 0
      %p119 = por %p117, %p118
      %p120 = scmp.ne.s32.totalorder %s106, %s107
      %p121 = scmp.eq.s32.totalorder %s24, 11
      %p122 = por %p120, %p121
      %p124 = scmp.ne.s32.totalorder %s107, %s123
      %p125 = scmp.eq.s32.totalorder %s24, 0
      %p126 = por %p124, %p125
      %s127 = ssub.s32 %s25, %s44
      %s128 = ssub.s32 %s26, %s40
      %s129 = sor.u32 %s127, %s128
      %p130 = scmp.eq.s32.totalorder %s129, 0
      %s132 = sadd.s32 %s131, 1
      %s133 = scalar_select %p130, %s131, %s132
      %p136 = pneg %p130
      %p137 = scmp.eq.s32.totalorder %s18, 11
      %p138 = por %p136, %p137
      %p139 = scmp.ne.s32.totalorder %s131, %s134
      %p140 = scmp.eq.s32.totalorder %s18, 0
      %p141 = por %p139, %p140
      %p142 = scmp.ne.s32.totalorder %s131, %s134
      %p143 = scmp.eq.s32.totalorder %s23, 11
      %p144 = por %p142, %p143
      %p145 = scmp.ne.s32.totalorder %s134, %s135
      %p146 = scmp.eq.s32.totalorder %s23, 0
      %p147 = por %p145, %p146
      %p148 = scmp.ne.s32.totalorder %s134, %s135
      %p149 = scmp.eq.s32.totalorder %s24, 11
      %p150 = por %p148, %p149
      %p152 = scmp.ne.s32.totalorder %s135, %s151
      %p153 = scmp.eq.s32.totalorder %s24, 0
      %p154 = por %p152, %p153
      %p155 = scmp.le.s32.totalorder 1, %s18
      %p156 = scmp.lt.s32.totalorder %s18, 13
      %p157 = pnand %p155, %p156
      %p158 = pneg %p157
      // Predicated region
      $region9: #{tpu_custom_call.1} parent=5 // pred_check
        _
      $region10: #{tpu_custom_call.1} parent=5 // pred_check_branch
        %160 = sbr.rel (%p157) target = $region12
      $region11: #{tpu_custom_call.1} parent=5 // pred_region
        %s161 = ssub.s32 %s18, 1
      $region12: #{tpu_custom_call.1} parent=5 // pred_fallthru
        _
      %p162 = scmp.lt.s32.totalorder %s18, 12
      // Predicated region
      $region13: #{tpu_custom_call.1} parent=5 // pred_check
        %p163 = pneg %p162
      $region14: #{tpu_custom_call.1} parent=5 // pred_check_branch
        %165 = sbr.rel (%p163) target = $region16
      $region15: #{tpu_custom_call.1} parent=5 // pred_region
        // Predicated region
        $region17: #{tpu_custom_call.1} parent=15 // pred_check
          %p166 = pneg %p59
        $region18: #{tpu_custom_call.1} parent=15 // pred_check_branch
          %168 = sbr.rel (%p166) target = $region20
        $region19: #{tpu_custom_call.1} parent=15 // pred_region
          %s169 = sand.u32 %s49, 1
          %s170 = scalar_lea.sflag [#allocation4], %s169
          %s171 = sand.u32 %s49, 1
          %s172 = smul.addr %s171, 64
          %s173 = scalar_lea.vmem [#allocation3], %s172
          %s174 = smul.u32 16, %s25
          %s176 = ssub.s32 1024, 1024
          %177 = vsyncadd %s170, %s176
          %s178 = smul.addr %s174, 3
          %s179 = sadd.s32 %s27, %s178
          %s180 = smul.addr %s179, 64
          %s181 = scalar_lea.hbm %s0, %s180
          %s182 = sshll.u32 %s173, 4
          %s183 = int_to_ptr.vmem [resolvable:$true] %s182
          %188 = dma.hbm_to_vmem [thread:$0]  %s181, 1024, %s183, %s170, 192, 64, 4
        $region20: #{tpu_custom_call.1} parent=15 // pred_fallthru
          _
        // Predicated region
        $region21: #{tpu_custom_call.1} parent=15 // pred_check
          %p189 = pneg %p87
        $region22: #{tpu_custom_call.1} parent=15 // pred_check_branch
          %191 = sbr.rel (%p189) target = $region24
        $region23: #{tpu_custom_call.1} parent=15 // pred_region
          %s192 = sand.u32 %s77, 1
          %s193 = scalar_lea.sflag [#allocation7], %s192
          %s194 = sand.u32 %s77, 1
          %s195 = smul.addr %s194, 64
          %s196 = scalar_lea.vmem [#allocation6], %s195
          %s197 = smul.u32 16, %s27
          %s199 = ssub.s32 1024, 1024
          %200 = vsyncadd %s193, %s199
          %s201 = smul.addr %s197, 2
          %s202 = sadd.s32 %s26, %s201
          %s203 = smul.addr %s202, 64
          %s204 = scalar_lea.hbm %s1, %s203
          %s205 = sshll.u32 %s196, 4
          %s206 = int_to_ptr.vmem [resolvable:$true] %s205
          %211 = dma.hbm_to_vmem [thread:$0]  %s204, 1024, %s206, %s193, 128, 64, 4
        $region24: #{tpu_custom_call.1} parent=15 // pred_fallthru
          _
        // Predicated region
        $region25: #{tpu_custom_call.1} parent=15 // pred_check
          %p212 = pneg %p113
        $region26: #{tpu_custom_call.1} parent=15 // pred_check_branch
          %214 = sbr.rel (%p212) target = $region28
        $region27: #{tpu_custom_call.1} parent=15 // pred_region
          %p215 = scmp.lt.s32.totalorder %s26, 1
          %s216 = scalar_select %p215, %s26, 1
          %s217 = scalar_lea.vmem %s2, %s216
        $region28: #{tpu_custom_call.1} parent=15 // pred_fallthru
          _
      $region16: #{tpu_custom_call.1} parent=5 // pred_fallthru
        _
      %p218 = scmp.le.s32.totalorder 1, %s18
      %p219 = scmp.lt.s32.totalorder %s18, 13
      %p220 = pnand %p218, %p219
      %p221 = pneg %p220
      // Predicated region
      $region29: #{tpu_custom_call.1} parent=5 // pred_check
        _
      $region30: #{tpu_custom_call.1} parent=5 // pred_check_branch
        %223 = sbr.rel (%p220) target = $region32
      $region31: #{tpu_custom_call.1} parent=5 // pred_region
        %s224 = ssub.s32 %s18, 1
        %s225 = sand.u32 %s52, 1
        %s226 = scalar_lea.sflag [#allocation4], %s225
        %s227 = sand.u32 %s52, 1
        %s228 = smul.addr %s227, 64
        %s229 = scalar_lea.vmem [#allocation3], %s228
        // Predicated region
        $region33: #{tpu_custom_call.1} parent=31 // pred_check
          %p230 = pneg %p65
        $region34: #{tpu_custom_call.1} parent=31 // pred_check_branch
          %232 = sbr.rel (%p230) target = $region36
        $region35: #{tpu_custom_call.1} parent=31 // pred_region
          %233 = dma.done %s226, 1024
        $region36: #{tpu_custom_call.1} parent=31 // pred_fallthru
          _
        %s234 = sand.u32 %s80, 1
        %s235 = scalar_lea.sflag [#allocation7], %s234
        %s236 = sand.u32 %s80, 1
        %s237 = smul.addr %s236, 64
        %s238 = scalar_lea.vmem [#allocation6], %s237
        // Predicated region
        $region37: #{tpu_custom_call.1} parent=31 // pred_check
          %p239 = pneg %p93
        $region38: #{tpu_custom_call.1} parent=31 // pred_check_branch
          %241 = sbr.rel (%p239) target = $region40
        $region39: #{tpu_custom_call.1} parent=31 // pred_region
          %242 = dma.done %s235, 1024
        $region40: #{tpu_custom_call.1} parent=31 // pred_fallthru
          _
        %s243 = sand.u32 %s52, 1
        %s244 = scalar_lea.sflag [#allocation4], %s243
        %s245 = sand.u32 %s52, 1
        %s246 = smul.addr %s245, 64
        %s247 = scalar_lea.vmem [#allocation3], %s246
        %p248 = pneg %p65
        %p249 = pneg %p62
        %s250 = sand.u32 %s80, 1
        %s251 = scalar_lea.sflag [#allocation7], %s250
        %s252 = sand.u32 %s80, 1
        %s253 = smul.addr %s252, 64
        %s254 = scalar_lea.vmem [#allocation6], %s253
        %p255 = pneg %p93
        %p256 = pneg %p90
        %p257 = scmp.lt.s32.totalorder %s29, 1
        %s258 = scalar_select %p257, %s29, 1
        %s259 = scalar_lea.vmem %s2, %s258
        %p260 = pneg %p119
        %p261 = pneg %p116
        %p262 = pneg %p147
        %p263 = pneg %p144
        %s264 = sand.u32 %s134, 1
        %s265 = scalar_lea.sflag [#allocation5], %s264
        %s266 = sand.u32 %s134, 1
        %s267 = smul.addr %s266, 128
        %s268 = scalar_lea.vmem [#allocation8], %s267
        %s269 = smul.u32 16, %s28
        %s270 = smul.u32 16, %s30
        %p271 = scmp.lt.s32.totalorder %s29, 1
        %s272 = scalar_select %p271, %s29, 1
        %s273 = scalar_lea.vmem %s2, %s272
        %s274 = smul.u32 16, %s28
        %p276 = scmp.eq.s32.totalorder %s30, 0
        // Predicated region
        $region41: #{tpu_custom_call.1} parent=31 // pred_check
          %p277 = pneg %p276
        $region42: #{tpu_custom_call.1} parent=31 // pred_check_branch
          %279 = sbr.rel (%p277) target = $region44
        $region43: #{tpu_custom_call.1} parent=31 // pred_region
          %280 = vst [vmem:[#allocation2] sm:$0xff] 0.0
          %281 = vst [vmem:[#allocation2 + $0x8] sm:$0xff] 0.0
          %282 = vst [vmem:[#allocation2 + $0x10] sm:$0xff] 0.0
          %283 = vst [vmem:[#allocation2 + $0x18] sm:$0xff] 0.0
          %284 = vst [vmem:[#allocation2 + $0x20] sm:$0xff] 0.0
          %285 = vst [vmem:[#allocation2 + $0x28] sm:$0xff] 0.0
          %286 = vst [vmem:[#allocation2 + $0x30] sm:$0xff] 0.0
          %287 = vst [vmem:[#allocation2 + $0x38] sm:$0xff] 0.0
          %288 = vst [vmem:[#allocation2 + $0x40] sm:$0xff] 0.0
          %289 = vst [vmem:[#allocation2 + $0x48] sm:$0xff] 0.0
          %290 = vst [vmem:[#allocation2 + $0x50] sm:$0xff] 0.0
          %291 = vst [vmem:[#allocation2 + $0x58] sm:$0xff] 0.0
          %292 = vst [vmem:[#allocation2 + $0x60] sm:$0xff] 0.0
          %293 = vst [vmem:[#allocation2 + $0x68] sm:$0xff] 0.0
          %294 = vst [vmem:[#allocation2 + $0x70] sm:$0xff] 0.0
          %295 = vst [vmem:[#allocation2 + $0x78] sm:$0xff] 0.0
        $region44: #{tpu_custom_call.1} parent=31 // pred_fallthru
          _
        %v296 = vld [vmem:[#allocation2] sm:$0xff]
        %v297 = vld [vmem:[#allocation2 + $0x8] sm:$0xff]
        %v298 = vld [vmem:[#allocation2 + $0x10] sm:$0xff]
        %v299 = vld [vmem:[#allocation2 + $0x18] sm:$0xff]
        %v300 = vld [vmem:[#allocation2 + $0x20] sm:$0xff]
        %v301 = vld [vmem:[#allocation2 + $0x28] sm:$0xff]
        %v302 = vld [vmem:[#allocation2 + $0x30] sm:$0xff]
        %v303 = vld [vmem:[#allocation2 + $0x38] sm:$0xff]
        %v304 = vld [vmem:[#allocation2 + $0x40] sm:$0xff]
        %v305 = vld [vmem:[#allocation2 + $0x48] sm:$0xff]
        %v306 = vld [vmem:[#allocation2 + $0x50] sm:$0xff]
        %v307 = vld [vmem:[#allocation2 + $0x58] sm:$0xff]
        %v308 = vld [vmem:[#allocation2 + $0x60] sm:$0xff]
        %v309 = vld [vmem:[#allocation2 + $0x68] sm:$0xff]
        %v310 = vld [vmem:[#allocation2 + $0x70] sm:$0xff]
        %v311 = vld [vmem:[#allocation2 + $0x78] sm:$0xff]
        %v312 = vld [vmem:[%s229] sm:$0xf]
        %v313 = vld [vmem:[%s229 + $0x4] sm:$0xf]
        %v314 = vld [vmem:[%s229 + $0x8] sm:$0xf]
        %v315 = vld [vmem:[%s229 + $0xc] sm:$0xf]
        %v316 = vld [vmem:[%s229 + $0x10] sm:$0xf]
        %v317 = vld [vmem:[%s229 + $0x14] sm:$0xf]
        %v318 = vld [vmem:[%s229 + $0x18] sm:$0xf]
        %v319 = vld [vmem:[%s229 + $0x1c] sm:$0xf]
        %v320 = vld [vmem:[%s229 + $0x20] sm:$0xf]
        %v321 = vld [vmem:[%s229 + $0x24] sm:$0xf]
        %v322 = vld [vmem:[%s229 + $0x28] sm:$0xf]
        %v323 = vld [vmem:[%s229 + $0x2c] sm:$0xf]
        %v324 = vld [vmem:[%s229 + $0x30] sm:$0xf]
        %v325 = vld [vmem:[%s229 + $0x34] sm:$0xf]
        %v326 = vld [vmem:[%s229 + $0x38] sm:$0xf]
        %v327 = vld [vmem:[%s229 + $0x3c] sm:$0xf]
        %v328 = vld [vmem:[%s238] sm:$0xf]
        %v329 = vld [vmem:[%s238 + $0x4] sm:$0xf]
        %v330 = vld [vmem:[%s238 + $0x8] sm:$0xf]
        %v331 = vld [vmem:[%s238 + $0xc] sm:$0xf]
        %v332 = vld [vmem:[%s238 + $0x10] sm:$0xf]
        %v333 = vld [vmem:[%s238 + $0x14] sm:$0xf]
        %v334 = vld [vmem:[%s238 + $0x18] sm:$0xf]
        %v335 = vld [vmem:[%s238 + $0x1c] sm:$0xf]
        %v336 = vld [vmem:[%s238 + $0x20] sm:$0xf]
        %v337 = vld [vmem:[%s238 + $0x24] sm:$0xf]
        %v338 = vld [vmem:[%s238 + $0x28] sm:$0xf]
        %v339 = vld [vmem:[%s238 + $0x2c] sm:$0xf]
        %v340 = vld [vmem:[%s238 + $0x30] sm:$0xf]
        %v341 = vld [vmem:[%s238 + $0x34] sm:$0xf]
        %v342 = vld [vmem:[%s238 + $0x38] sm:$0xf]
        %v343 = vld [vmem:[%s238 + $0x3c] sm:$0xf]
        %v360 = vunpack.c.l.b16 %v312
        %v361 = vunpack.c.l.b16 %v313
        %v362 = vunpack.c.l.b16 %v314
        %v363 = vunpack.c.l.b16 %v315
        %v364 = vunpack.c.l.b16 %v316
        %v365 = vunpack.c.l.b16 %v317
        %v366 = vunpack.c.l.b16 %v318
        %v367 = vunpack.c.l.b16 %v319
        %v368 = vunpack.c.l.b16 %v320
        %v369 = vunpack.c.l.b16 %v321
        %v370 = vunpack.c.l.b16 %v322
        %v371 = vunpack.c.l.b16 %v323
        %v372 = vunpack.c.l.b16 %v324
        %v373 = vunpack.c.l.b16 %v325
        %v374 = vunpack.c.l.b16 %v326
        %v375 = vunpack.c.l.b16 %v327
        %v376 = vpack.c.b16 %v361, %v360
        %v377 = vpack.c.b16 %v363, %v362
        %v378 = vpack.c.b16 %v365, %v364
        %v379 = vpack.c.b16 %v367, %v366
        %v380 = vpack.c.b16 %v369, %v368
        %v381 = vpack.c.b16 %v371, %v370
        %v382 = vpack.c.b16 %v373, %v372
        %v383 = vpack.c.b16 %v375, %v374
        %v408 = vunpack.c.l.b16 %v328
        %v409 = vunpack.c.l.b16 %v329
        %v410 = vunpack.c.l.b16 %v330
        %v411 = vunpack.c.l.b16 %v331
        %v412 = vunpack.c.l.b16 %v332
        %v413 = vunpack.c.l.b16 %v333
        %v414 = vunpack.c.l.b16 %v334
        %v415 = vunpack.c.l.b16 %v335
        %v416 = vunpack.c.l.b16 %v336
        %v417 = vunpack.c.l.b16 %v337
        %v418 = vunpack.c.l.b16 %v338
        %v419 = vunpack.c.l.b16 %v339
        %v420 = vunpack.c.l.b16 %v340
        %v421 = vunpack.c.l.b16 %v341
        %v422 = vunpack.c.l.b16 %v342
        %v423 = vunpack.c.l.b16 %v343
        %v424 = vpack.c.b16 %v409, %v408
        %v425 = vpack.c.b16 %v411, %v410
        %v426 = vpack.c.b16 %v413, %v412
        %v427 = vpack.c.b16 %v415, %v414
        %v428 = vpack.c.b16 %v417, %v416
        %v429 = vpack.c.b16 %v419, %v418
        %v430 = vpack.c.b16 %v421, %v420
        %v431 = vpack.c.b16 %v423, %v422
        %440 = vmatprep.subr.bf16.mxu0 0
        %441 = vmatpush1.bf16.msra.mxu0 %v431
        %442 = vmatprep.subr.bf16.mxu0 0
        %443 = vmatpush1.bf16.msra.mxu0 %v430
        %444 = vmatprep.subr.bf16.mxu0 0
        %445 = vmatpush1.bf16.msra.mxu0 %v429
        %446 = vmatprep.subr.bf16.mxu0 0
        %447 = vmatpush1.bf16.msra.mxu0 %v428
        %448 = vmatprep.subr.bf16.mxu0 0
        %449 = vmatpush1.bf16.msra.mxu0 %v427
        %450 = vmatprep.subr.bf16.mxu0 0
        %451 = vmatpush1.bf16.msra.mxu0 %v426
        %452 = vmatprep.subr.bf16.mxu0 0
        %453 = vmatpush1.bf16.msra.mxu0 %v425
        %454 = vmatprep.subr.bf16.mxu0 0
        %455 = vmatpush1.bf16.msra.mxu0 %v424
        %456 = vmatprep.subr.bf16.mxu0 0
        %457 = vmatpush2.bf16.msra.mxu0 0
        %458 = vmatprep.subr.bf16.mxu0 0
        %459 = vmatpush2.bf16.msra.mxu0 0
        %460 = vmatprep.subr.bf16.mxu0 0
        %461 = vmatpush2.bf16.msra.mxu0 0
        %462 = vmatprep.subr.bf16.mxu0 0
        %463 = vmatpush2.bf16.msra.mxu0 0
        %464 = vmatprep.subr.bf16.mxu0 0
        %465 = vmatpush2.bf16.msra.mxu0 0
        %466 = vmatprep.subr.bf16.mxu0 0
        %467 = vmatpush2.bf16.msra.mxu0 0
        %468 = vmatprep.subr.bf16.mxu0 0
        %469 = vmatpush2.bf16.msra.mxu0 0
        %470 = vmatprep.subr.bf16.mxu0 0
        %471 = vmatpush2.bf16.msra.mxu0 0
        %472 = vmatprep.mubr.bf16.mxu0 0
        %473 = vmatmul.mubr.bf16.gmra.mxu0 %v376
        %v474 = vpop.f32.mrf.mxu0
        %v475 = vadd.f32 0.0, %v474
        %v476 = vpop.f32.mrf.mxu0
        %v477 = vpop.f32.mrf.mxu0
        %v478 = vadd.f32 0.0, %v477
        %v479 = vpop.f32.mrf.mxu0
        %480 = vmatprep.mubr.bf16.mxu0 0
        %481 = vmatmul.mubr.bf16.gmra.mxu0 %v377
        %v482 = vpop.f32.mrf.mxu0
        %v483 = vadd.f32 0.0, %v482
        %v484 = vpop.f32.mrf.mxu0
        %v485 = vpop.f32.mrf.mxu0
        %v486 = vadd.f32 0.0, %v485
        %v487 = vpop.f32.mrf.mxu0
        %488 = vmatprep.mubr.bf16.mxu0 0
        %489 = vmatmul.mubr.bf16.gmra.mxu0 %v378
        %v490 = vpop.f32.mrf.mxu0
        %v491 = vadd.f32 0.0, %v490
        %v492 = vpop.f32.mrf.mxu0
        %v493 = vpop.f32.mrf.mxu0
        %v494 = vadd.f32 0.0, %v493
        %v495 = vpop.f32.mrf.mxu0
        %496 = vmatprep.mubr.bf16.mxu0 0
        %497 = vmatmul.mubr.bf16.gmra.mxu0 %v379
        %v498 = vpop.f32.mrf.mxu0
        %v499 = vadd.f32 0.0, %v498
        %v500 = vpop.f32.mrf.mxu0
        %v501 = vpop.f32.mrf.mxu0
        %v502 = vadd.f32 0.0, %v501
        %v503 = vpop.f32.mrf.mxu0
        %504 = vmatprep.mubr.bf16.mxu0 0
        %505 = vmatmul.mubr.bf16.gmra.mxu0 %v380
        %v506 = vpop.f32.mrf.mxu0
        %v507 = vadd.f32 0.0, %v506
        %v508 = vpop.f32.mrf.mxu0
        %v509 = vpop.f32.mrf.mxu0
        %v510 = vadd.f32 0.0, %v509
        %v511 = vpop.f32.mrf.mxu0
        %512 = vmatprep.mubr.bf16.mxu0 0
        %513 = vmatmul.mubr.bf16.gmra.mxu0 %v381
        %v514 = vpop.f32.mrf.mxu0
        %v515 = vadd.f32 0.0, %v514
        %v516 = vpop.f32.mrf.mxu0
        %v517 = vpop.f32.mrf.mxu0
        %v518 = vadd.f32 0.0, %v517
        %v519 = vpop.f32.mrf.mxu0
        %520 = vmatprep.mubr.bf16.mxu0 0
        %521 = vmatmul.mubr.bf16.gmra.mxu0 %v382
        %v522 = vpop.f32.mrf.mxu0
        %v523 = vadd.f32 0.0, %v522
        %v524 = vpop.f32.mrf.mxu0
        %v525 = vpop.f32.mrf.mxu0
        %v526 = vadd.f32 0.0, %v525
        %v527 = vpop.f32.mrf.mxu0
        %528 = vmatprep.mubr.bf16.mxu0 0
        %529 = vmatmul.mubr.bf16.gmra.mxu0 %v383
        %v530 = vpop.f32.mrf.mxu0
        %v531 = vadd.f32 0.0, %v530
        %v532 = vpop.f32.mrf.mxu0
        %v533 = vpop.f32.mrf.mxu0
        %v534 = vadd.f32 0.0, %v533
        %v535 = vpop.f32.mrf.mxu0
        %536 = vdwg.mxu0
        %v537 = vadd.f32 %v296, %v475
        %v538 = vadd.f32 %v297, %v478
        %v539 = vadd.f32 %v298, %v483
        %v540 = vadd.f32 %v299, %v486
        %v541 = vadd.f32 %v300, %v491
        %v542 = vadd.f32 %v301, %v494
        %v543 = vadd.f32 %v302, %v499
        %v544 = vadd.f32 %v303, %v502
        %v545 = vadd.f32 %v304, %v507
        %v546 = vadd.f32 %v305, %v510
        %v547 = vadd.f32 %v306, %v515
        %v548 = vadd.f32 %v307, %v518
        %v549 = vadd.f32 %v308, %v523
        %v550 = vadd.f32 %v309, %v526
        %v551 = vadd.f32 %v310, %v531
        %v552 = vadd.f32 %v311, %v534
        %553 = vst [vmem:[#allocation2] sm:$0xff] %v537
        %554 = vst [vmem:[#allocation2 + $0x8] sm:$0xff] %v538
        %555 = vst [vmem:[#allocation2 + $0x10] sm:$0xff] %v539
        %556 = vst [vmem:[#allocation2 + $0x18] sm:$0xff] %v540
        %557 = vst [vmem:[#allocation2 + $0x20] sm:$0xff] %v541
        %558 = vst [vmem:[#allocation2 + $0x28] sm:$0xff] %v542
        %559 = vst [vmem:[#allocation2 + $0x30] sm:$0xff] %v543
        %560 = vst [vmem:[#allocation2 + $0x38] sm:$0xff] %v544
        %561 = vst [vmem:[#allocation2 + $0x40] sm:$0xff] %v545
        %562 = vst [vmem:[#allocation2 + $0x48] sm:$0xff] %v546
        %563 = vst [vmem:[#allocation2 + $0x50] sm:$0xff] %v547
        %564 = vst [vmem:[#allocation2 + $0x58] sm:$0xff] %v548
        %565 = vst [vmem:[#allocation2 + $0x60] sm:$0xff] %v549
        %566 = vst [vmem:[#allocation2 + $0x68] sm:$0xff] %v550
        %567 = vst [vmem:[#allocation2 + $0x70] sm:$0xff] %v551
        %568 = vst [vmem:[#allocation2 + $0x78] sm:$0xff] %v552
        %p569 = scmp.eq.s32.totalorder %s30, 2
        // Predicated region
        $region45: #{tpu_custom_call.1} parent=31 // pred_check
          %p570 = pneg %p569
        $region46: #{tpu_custom_call.1} parent=31 // pred_check_branch
          %572 = sbr.rel (%p570) target = $region48
        $region47: #{tpu_custom_call.1} parent=31 // pred_region
          %v573 = vld [vmem:[#allocation2] sm:$0xff]
          %v574 = vld [vmem:[#allocation2 + $0x8] sm:$0xff]
          %v575 = vld [vmem:[#allocation2 + $0x10] sm:$0xff]
          %v576 = vld [vmem:[#allocation2 + $0x18] sm:$0xff]
          %v577 = vld [vmem:[#allocation2 + $0x20] sm:$0xff]
          %v578 = vld [vmem:[#allocation2 + $0x28] sm:$0xff]
          %v579 = vld [vmem:[#allocation2 + $0x30] sm:$0xff]
          %v580 = vld [vmem:[#allocation2 + $0x38] sm:$0xff]
          %v581 = vld [vmem:[#allocation2 + $0x40] sm:$0xff]
          %v582 = vld [vmem:[#allocation2 + $0x48] sm:$0xff]
          %v583 = vld [vmem:[#allocation2 + $0x50] sm:$0xff]
          %v584 = vld [vmem:[#allocation2 + $0x58] sm:$0xff]
          %v585 = vld [vmem:[#allocation2 + $0x60] sm:$0xff]
          %v586 = vld [vmem:[#allocation2 + $0x68] sm:$0xff]
          %v587 = vld [vmem:[#allocation2 + $0x70] sm:$0xff]
          %v588 = vld [vmem:[#allocation2 + $0x78] sm:$0xff]
          %v589 = vld [vmem:[%s273] sm:$0x1]
          %v591 = vlaneseq
          %v592 = vshrl.u32 %v591, 7
          %v593 = vsub.s32 0, %v592
          %v594 = vrot.slane %v589, %v593
          %v596 = vadd.f32 %v573, %v594
          %v597 = vadd.f32 %v574, %v594
          %v598 = vadd.f32 %v575, %v594
          %v599 = vadd.f32 %v576, %v594
          %v600 = vadd.f32 %v577, %v594
          %v601 = vadd.f32 %v578, %v594
          %v602 = vadd.f32 %v579, %v594
          %v603 = vadd.f32 %v580, %v594
          %v604 = vadd.f32 %v581, %v594
          %v605 = vadd.f32 %v582, %v594
          %v606 = vadd.f32 %v583, %v594
          %v607 = vadd.f32 %v584, %v594
          %v608 = vadd.f32 %v585, %v594
          %v609 = vadd.f32 %v586, %v594
          %v610 = vadd.f32 %v587, %v594
          %v611 = vadd.f32 %v588, %v594
          %612 = vst [vmem:[%s268] sm:$0xff] %v596
          %613 = vst [vmem:[%s268 + $0x8] sm:$0xff] %v597
          %614 = vst [vmem:[%s268 + $0x10] sm:$0xff] %v598
          %615 = vst [vmem:[%s268 + $0x18] sm:$0xff] %v599
          %616 = vst [vmem:[%s268 + $0x20] sm:$0xff] %v600
          %617 = vst [vmem:[%s268 + $0x28] sm:$0xff] %v601
          %618 = vst [vmem:[%s268 + $0x30] sm:$0xff] %v602
          %619 = vst [vmem:[%s268 + $0x38] sm:$0xff] %v603
          %620 = vst [vmem:[%s268 + $0x40] sm:$0xff] %v604
          %621 = vst [vmem:[%s268 + $0x48] sm:$0xff] %v605
          %622 = vst [vmem:[%s268 + $0x50] sm:$0xff] %v606
          %623 = vst [vmem:[%s268 + $0x58] sm:$0xff] %v607
          %624 = vst [vmem:[%s268 + $0x60] sm:$0xff] %v608
          %625 = vst [vmem:[%s268 + $0x68] sm:$0xff] %v609
          %626 = vst [vmem:[%s268 + $0x70] sm:$0xff] %v610
          %627 = vst [vmem:[%s268 + $0x78] sm:$0xff] %v611
        $region48: #{tpu_custom_call.1} parent=31 // pred_fallthru
          _
        %s628 = sand.u32 %s134, 1
        %s629 = scalar_lea.sflag [#allocation5], %s628
        %s630 = sand.u32 %s134, 1
        %s631 = smul.addr %s630, 128
        %s632 = scalar_lea.vmem [#allocation8], %s631
        // Predicated region
        $region49: #{tpu_custom_call.1} parent=31 // pred_check
          %p633 = pneg %p144
        $region50: #{tpu_custom_call.1} parent=31 // pred_check_branch
          %635 = sbr.rel (%p633) target = $region52
        $region51: #{tpu_custom_call.1} parent=31 // pred_region
          %s636 = smul.u32 16, %s28
          %s638 = ssub.s32 2048, 2048
          %639 = vsyncadd %s629, %s638
          %s640 = smul.addr %s636, 2
          %s641 = sadd.s32 %s29, %s640
          %s642 = smul.addr %s641, 128
          %s643 = scalar_lea.hbm %s3, %s642
          %s644 = sshll.u32 %s632, 4
          %s645 = int_to_ptr.vmem [resolvable:$true] %s644
          %650 = dma.vmem_to_hbm [thread:$0]  %s645, 2048, %s643, %s629, 128, 256, 8
        $region52: #{tpu_custom_call.1} parent=31 // pred_fallthru
          _
      $region32: #{tpu_custom_call.1} parent=5 // pred_fallthru
        _
      %p651 = scmp.le.s32.totalorder 2, %s18
      // Predicated region
      $region53: #{tpu_custom_call.1} parent=5 // pred_check
        %p652 = pneg %p651
      $region54: #{tpu_custom_call.1} parent=5 // pred_check_branch
        %654 = sbr.rel (%p652) target = $region56
      $region55: #{tpu_custom_call.1} parent=5 // pred_region
        %s655 = ssub.s32 %s18, 2
        // Predicated region
        $region57: #{tpu_custom_call.1} parent=55 // pred_check
          %p656 = pneg %p150
        $region58: #{tpu_custom_call.1} parent=55 // pred_check_branch
          %658 = sbr.rel (%p656) target = $region60
        $region59: #{tpu_custom_call.1} parent=55 // pred_region
          %s659 = sand.u32 %s135, 1
          %s660 = scalar_lea.sflag [#allocation5], %s659
          %s661 = sand.u32 %s135, 1
          %s662 = smul.addr %s661, 128
          %s663 = scalar_lea.vmem [#allocation8], %s662
          %664 = dma.done %s660, 2048
        $region60: #{tpu_custom_call.1} parent=55 // pred_fallthru
          _
      $region56: #{tpu_custom_call.1} parent=5 // pred_fallthru
        _
    $region6: #{tpu_custom_call.1} parent=1 // loop_footer
      %s22 = sadd.s32 1, %s18
    $region7: #{tpu_custom_call.1} parent=1 // loop_footer_branch
      %17 = sbr.rel target = $region3
    $region8: #{tpu_custom_call.1} parent=1 // loop_exit
      _
    %665 = vsyncpa [#allocation4], 1
    %s666 = scalar_lea.sflag [#allocation4], 1
    %667 = vsyncpa %s666, 1
    %668 = vsyncpa [#allocation7], 1
    %s669 = scalar_lea.sflag [#allocation7], 1
    %670 = vsyncpa %s669, 1
    %671 = vsyncpa [#allocation5], 1
    %s672 = scalar_lea.sflag [#allocation5], 1
    %673 = vsyncpa %s672, 1

</llo_original>
